<compile_context>
chip_gen: v6e
topology: v6e:2x2x1
jax: 0.10.0
libtpu: 0.0.40
codegen_flags: <defaults>
</compile_context>

<pallas_src>
import functools

import jax
import jax.numpy as jnp
from jax.experimental import pallas as pl
from jax.experimental.pallas import tpu as pltpu


def _sct_mine_kernel(semi, compute_idx, n_real, n_pad,
                     lab_k_ref, lab_q_ref, xk_ref, xq_ref, out_ref,
                     vpos_ref, ipos_ref, vneg_ref, ineg_ref, *cache):
    """Mine hardest positive / negative for one (key-chunk, query-tile) step.

    Chunk layout is transposed (keys along sublanes, queries along lanes) so
    the per-query reductions land directly in lane-dense (1, TILE_M) rows.
    Running accumulators live in VMEM scratch across the key-chunk grid axis.
    """
    tile_k = xk_ref.shape[0]
    tile_m = out_ref.shape[1]
    i = pl.program_id(0)
    k = pl.program_id(1)
    num_k = pl.num_programs(1)

    @pl.when(k == 0)
    def _init():
        vpos_ref[...] = jnp.full_like(vpos_ref, -jnp.inf)
        vneg_ref[...] = jnp.full_like(vneg_ref, -jnp.inf)
        ipos_ref[...] = jnp.zeros_like(ipos_ref)
        ineg_ref[...] = jnp.zeros_like(ineg_ref)

    k_start = pl.multiple_of(k * tile_k, tile_k)
    q_start = pl.multiple_of(i * tile_m, tile_m)

    # (tile_k, tile_m) cosine-similarity chunk; bf16/f32 feed, f32 MXU accum.
    cos = jax.lax.dot_general(
        xk_ref[...], xq_ref[...], (((1,), (1,)), ((), ())),
        preferred_element_type=jnp.float32)

    key_idx = jax.lax.broadcasted_iota(jnp.int32, (tile_k, tile_m), 0) + k_start
    q_idx = jax.lax.broadcasted_iota(jnp.int32, (tile_k, tile_m), 1) + q_start
    same = lab_k_ref[...] == lab_q_ref[...]            # (tile_k,1)==(1,tile_m)
    is_diag = key_idx == q_idx

    # Fused masks: one predicate + one select per branch.
    bad_p = jnp.logical_not(same) | is_diag | (cos > 0.9999)
    bad_n = same                                        # label-equality covers diag
    if n_real < n_pad:
        # Padded key rows (label 0, cos 0) must never be mined as pos OR neg.
        is_pad = key_idx >= n_real
        bad_p = bad_p | is_pad
        bad_n = bad_n | is_pad
    d_p = jnp.where(bad_p, -1.0, cos)
    d_n = jnp.where(bad_n, -1.0, cos)

    big = float(n_pad)
    if compute_idx:
        key_f = key_idx.astype(jnp.float32)             # exact for N < 2**24

    # ---- positive mining: running max (+ first-occurrence argmax) ----
    cv_p = jnp.max(d_p, axis=0, keepdims=True)          # (1, tile_m)
    take_p = cv_p > vpos_ref[...]                        # strict > keeps earliest index
    if compute_idx:
        ci_p = jnp.min(jnp.where(d_p == cv_p, key_f, big), axis=0, keepdims=True)
        ipos_ref[...] = jnp.where(take_p, ci_p, ipos_ref[...])
    vpos_ref[...] = jnp.where(take_p, cv_p, vpos_ref[...])

    if not semi:
        # ---- negative mining (no semi-hard filter): running max ----
        cv_n = jnp.max(d_n, axis=0, keepdims=True)
        take_n = cv_n > vneg_ref[...]
        if compute_idx:
            ci_n = jnp.min(jnp.where(d_n == cv_n, key_f, big), axis=0, keepdims=True)
            ineg_ref[...] = jnp.where(take_n, ci_n, ineg_ref[...])
        vneg_ref[...] = jnp.where(take_n, cv_n, vneg_ref[...])
    else:
        # 'shn': the semi-hard filter needs the FINAL V_pos, so cache the
        # masked negatives and run a cheap second VPU pass at the last chunk.
        cache[0][pl.ds(k_start, tile_k), :] = d_n

    @pl.when(k == num_k - 1)
    def _finish():
        if semi:
            vp = vpos_ref[...]
            num_chunks = n_pad // tile_k
            base_f = jax.lax.broadcasted_iota(jnp.float32, (tile_k, tile_m), 0)

            @pl.loop(0, num_chunks)
            def _(j):
                start = pl.multiple_of(j * tile_k, tile_k)
                dn = cache[0][pl.ds(start, tile_k), :]
                # '& Diff' of the reference is redundant: same-class entries
                # are already -1 in the cache and -1 > V_pos never holds.
                dn = jnp.where(dn > vp, -1.0, dn)
                cv = jnp.max(dn, axis=0, keepdims=True)
                take = cv > vneg_ref[...]
                if compute_idx:
                    kf = base_f + (j * tile_k).astype(jnp.float32)
                    ci = jnp.min(jnp.where(dn == cv, kf, big),
                                 axis=0, keepdims=True)
                    ineg_ref[...] = jnp.where(take, ci, ineg_ref[...])
                vneg_ref[...] = jnp.where(take, cv, vneg_ref[...])

        # Lane-dense packed rows: 0=Pos(V_pos) 1=Neg(V_neg) 2=I_pos 3=I_neg.
        # Four 1-sublane stores, once per query tile (not per chunk).
        out_ref[0:1, :] = vpos_ref[...]
        out_ref[1:2, :] = vneg_ref[...]
        out_ref[2:3, :] = ipos_ref[...]
        out_ref[3:4, :] = ineg_ref[...]


def _finalize(pos, neg, i_pos, i_neg, use_sct, lam):
    """O(N) scalar glue; value-matches the PyTorch reference (branch via where)."""
    mask_valid = (pos > -1.0) & (pos < 1.0) & (neg > -1.0) & (neg < 1.0)
    hard_mask = ((neg > pos) | (neg > 0.8)) & mask_valid
    easy_mask = (neg < pos) & (neg < 0.8) & mask_valid

    n_valid = jnp.sum(mask_valid.astype(jnp.float32))
    hn_num = jnp.sum(((neg > pos) & mask_valid).astype(jnp.float32))
    hn_ratio = jnp.where(n_valid > 0, hn_num / jnp.maximum(n_valid, 1.0), jnp.nan)

    triplet_val = jnp.stack([pos, neg], axis=1)
    triplet_idx = jnp.stack([i_pos, i_neg], axis=1)

    # -log_softmax([Pos, Neg]/0.1, dim=1)[:, 0] == softplus((Neg - Pos)/0.1)
    per_row = jax.nn.softplus((neg - pos) / 0.1)

    if use_sct:
        loss_hard = jnp.sum(jnp.where(hard_mask, neg, 0.0))
        loss_easy = jnp.sum(jnp.where(easy_mask, per_row, 0.0))
        n_hard = jnp.sum(hard_mask.astype(jnp.float32))
        n_easy = jnp.sum(easy_mask.astype(jnp.float32))
        bad_h = jnp.isnan(loss_hard) | (n_hard == 0)
        loss_hard = jnp.where(bad_h, 0.0, loss_hard)
        n_hard = jnp.where(bad_h, 0.0, n_hard)
        bad_e = jnp.isnan(loss_easy) | (n_easy == 0)
        loss_easy = jnp.where(bad_e, 0.0, loss_easy)
        n_easy = jnp.where(bad_e, 0.0, n_easy)
        denom = n_easy + n_hard
        denom = jnp.where(denom == 0, 1.0, denom)
        loss = (loss_easy + lam * loss_hard) / denom
    else:  # 'hn' / 'shn': mean over valid rows (NaN on empty, like torch)
        loss_sum = jnp.sum(jnp.where(mask_valid, per_row, 0.0))
        loss = jnp.where(n_valid > 0, loss_sum / jnp.maximum(n_valid, 1.0), jnp.nan)
    return loss, triplet_val, triplet_idx, hn_ratio


def _round_up(x, m):
    return ((x + m - 1) // m) * m


def sct_loss(fvec, lvec, method="sct", lam=1.0, tile_m=None, tile_k=None,
             mxu_dtype=jnp.bfloat16, compute_idx=True):
    """SCTLoss forward. Returns (loss, triplet_val, triplet_idx, hn_ratio).

    tile_m: query rows (lanes) per grid step; auto: 256 for n>256 (good on
            v6e/v7x), else 128 (always full MXU rate, incl. v5e).
    tile_k: keys (sublanes) per chunk; auto: 512 for n>512 else tile_m.
    mxu_dtype: jnp.bfloat16 (fast, native MXU rate) or jnp.float32 (bit-closer
            mining parity with the PyTorch reference near the 0.9999 / 0.8 /
            neg>pos thresholds).
    compute_idx: set False to skip the I_pos/I_neg (argmax index) path when
            triplet_idx is not consumed (it is logging-only in the reference).
    """
    assert method in ("sct", "hn", "shn")
    use_sct = method == "sct"
    semi = method == "shn"

    n, d = fvec.shape
    assert n < (1 << 24)  # indices round-trip exactly through f32
    if tile_m is None:
        tile_m = 256 if n > 256 else 128
    if tile_k is None:
        tile_k = 512 if n > 512 else tile_m
    assert tile_m % 128 == 0 and tile_k % 128 == 0
    assert max(tile_m, tile_k) % min(tile_m, tile_k) == 0
    pad_to = max(tile_m, tile_k)
    n_pad = _round_up(n, pad_to)
    d_pad = _round_up(d, 128)
    num_q = n_pad // tile_m
    num_k = n_pad // tile_k

    # F.normalize(p=2, dim=1, eps=1e-12) in f32 via rsqrt; zero-pad is free
    # after normalization; feed the MXU in mxu_dtype (bf16 by default).
    x = fvec.astype(jnp.float32)
    inv = jax.lax.rsqrt(jnp.maximum(jnp.sum(x * x, axis=1, keepdims=True), 1e-24))
    xn = jnp.pad(x * inv, ((0, n_pad - n), (0, d_pad - d))).astype(mxu_dtype)

    lab = jnp.pad(lvec.reshape(-1).astype(jnp.int32), (0, n_pad - n))
    lab_col = lab.reshape(n_pad, 1)   # key labels (sublane-oriented, chunked)
    lab_row = lab.reshape(1, n_pad)   # query labels (lane-oriented, tiled)

    itemsize = jnp.dtype(mxu_dtype).itemsize
    scratch = [pltpu.VMEM((1, tile_m), jnp.float32) for _ in range(4)]
    if semi:
        scratch.append(pltpu.VMEM((n_pad, tile_m), jnp.float32))  # d_n cache

    # Footprint-driven VMEM budget: double-buffered tiles + accumulators +
    # (shn) cache + headroom for elementwise temporaries.
    vmem_bytes = (
        2 * (tile_k + tile_m) * d_pad * itemsize       # key / query tiles
        + 2 * (tile_k + tile_m) * 4                    # labels
        + 2 * 4 * tile_m * 4                           # packed output block
        + 4 * tile_m * 4                               # accumulators
        + (n_pad * tile_m * 4 if semi else 0)          # shn negative cache
        + 12 * tile_k * tile_m * 4)                    # chunk temporaries
    vmem_limit = int(min(max(vmem_bytes, 32 << 20), 100 << 20))

    packed = pl.pallas_call(
        functools.partial(_sct_mine_kernel, semi, compute_idx, n, n_pad),
        grid=(num_q, num_k),
        in_specs=[
            pl.BlockSpec((tile_k, 1), lambda i, k: (k, 0)),        # key labels
            pl.BlockSpec((1, tile_m), lambda i, k: (0, i)),        # query labels
            pl.BlockSpec((tile_k, d_pad), lambda i, k: (k, 0)),    # key tile
            pl.BlockSpec((tile_m, d_pad), lambda i, k: (i, 0)),    # query tile
        ],
        out_specs=pl.BlockSpec((4, tile_m), lambda i, k: (0, i)),
        out_shape=jax.ShapeDtypeStruct((4, n_pad), jnp.float32),
        scratch_shapes=scratch,
        compiler_params=pltpu.CompilerParams(
            dimension_semantics=("parallel", "arbitrary"),
            vmem_limit_bytes=vmem_limit),
        cost_estimate=pl.CostEstimate(
            flops=2 * n_pad * n_pad * d_pad,
            transcendentals=0,
            bytes_accessed=(num_q + 1) * n_pad * d_pad * itemsize
                           + 2 * n_pad * 4 + 4 * n_pad * 4),
    )(lab_col, lab_row, xn, xn)

    pos = packed[0, :n]                      # == gathered Pos on all valid rows
    neg = packed[1, :n]                      # == gathered Neg on all valid rows
    i_pos = packed[2, :n].astype(jnp.int32)
    i_neg = packed[3, :n].astype(jnp.int32)

    return _finalize(pos, neg, i_pos, i_neg, use_sct, lam)


def _sct_loss_reference(fvec, lvec, method="sct", lam=1.0):
    """Plain-JAX reference (f32) for correctness checking."""
    n = fvec.shape[0]
    x = fvec.astype(jnp.float32)
    xn = x / jnp.maximum(jnp.sqrt(jnp.sum(x * x, axis=1, keepdims=True)), 1e-12)
    cos = xn @ xn.T
    idx = jnp.arange(n)
    cos = cos.at[idx, idx].set(-1.0)
    lab = lvec.reshape(-1)
    same = lab[:, None] == lab[None, :]
    diff = ~same
    d_p = jnp.where(diff, -1.0, cos)
    d_p = jnp.where(d_p > 0.9999, -1.0, d_p)
    v_pos = d_p.max(axis=1)
    i_pos = jnp.argmax(d_p, axis=1).astype(jnp.int32)
    d_n = jnp.where(same, -1.0, cos)
    if method == "shn":
        d_n = jnp.where((d_n > v_pos[:, None]) & diff, -1.0, d_n)
    v_neg = d_n.max(axis=1)
    i_neg = jnp.argmax(d_n, axis=1).astype(jnp.int32)
    return _finalize(v_pos, v_neg, i_pos, i_neg, method == "sct", lam)


if __name__ == "__main__":
    key = jax.random.PRNGKey(0)
    k_f, k_l = jax.random.split(key)
    N, D = 8, 32
    fvec = jax.random.normal(k_f, (N, D), dtype=jnp.float32)
    lvec = jax.random.randint(k_l, (N,), 0, 4, dtype=jnp.int32)

    for method in ("sct", "hn", "shn"):
        ref = _sct_loss_reference(fvec, lvec, method=method, lam=1.0)
        got = sct_loss(fvec, lvec, method=method, lam=1.0, mxu_dtype=jnp.float32)
        assert jnp.allclose(got[0], ref[0], atol=5e-2, equal_nan=True), method
        assert jnp.allclose(got[3], ref[3], atol=5e-2, equal_nan=True), method

    # Multi-chunk / multi-tile / padded-row coverage (2 query tiles x 2 key chunks).
    N2, D2 = 200, 64
    f2 = jax.random.normal(jax.random.PRNGKey(1), (N2, D2), dtype=jnp.float32)
    l2 = jax.random.randint(jax.random.PRNGKey(2), (N2,), 0, 16, dtype=jnp.int32)
    for method in ("sct", "hn", "shn"):
        ref = _sct_loss_reference(f2, l2, method=method, lam=1.0)
        got = sct_loss(f2, l2, method=method, lam=1.0,
                       tile_m=128, tile_k=128, mxu_dtype=jnp.float32)
        assert jnp.allclose(got[0], ref[0], atol=5e-2, equal_nan=True), method
        assert jnp.allclose(got[3], ref[3], atol=5e-2, equal_nan=True), method

    # Default fast path: bf16 MXU feed.
    loss, tval, tidx, hn_ratio = sct_loss(fvec, lvec, method="sct", lam=1.0)
    jax.block_until_ready((loss, tval, tidx, hn_ratio))
    print("KERNEL_OK")
</pallas_src>

<mosaic_0001>
module attributes {stable_mosaic.version = 11 : i64} {
  func.func @_sct_mine_kernel(%arg0: i32, %arg1: i32, %arg2: memref<128x1xi32, #tpu.memory_space<vmem>>, %arg3: memref<1x128xi32, #tpu.memory_space<vmem>>, %arg4: memref<128x128xf32, #tpu.memory_space<vmem>>, %arg5: memref<128x128xf32, #tpu.memory_space<vmem>>, %arg6: memref<4x128xf32, #tpu.memory_space<vmem>>, %arg7: memref<1x128xf32, #tpu.memory_space<vmem>>, %arg8: memref<1x128xf32, #tpu.memory_space<vmem>>, %arg9: memref<1x128xf32, #tpu.memory_space<vmem>>, %arg10: memref<1x128xf32, #tpu.memory_space<vmem>>) attributes {dimension_semantics = [#tpu.dimension_semantics<parallel>, #tpu.dimension_semantics<arbitrary>], iteration_bounds = array<i64: 1, 1>, scalar_prefetch = 0 : i64, scratch_operands = 4 : i64, tpu.core_type = #tpu.core_type<tc>, window_params = [{transform_indices = @transform_0, window_bounds = array<i64: 128, 1>}, {transform_indices = @transform_1, window_bounds = array<i64: 1, 128>}, {transform_indices = @transform_2, window_bounds = array<i64: 128, 128>}, {transform_indices = @transform_3, window_bounds = array<i64: 128, 128>}, {transform_indices = @transform_4, window_bounds = array<i64: 4, 128>}]} {
    %c0_i32 = arith.constant 0 : i32
    %0 = arith.cmpi eq, %arg1, %c0_i32 : i32
    %1 = arith.extui %0 : i1 to i32
    %c0_i32_0 = arith.constant 0 : i32
    %2 = arith.cmpi ne, %1, %c0_i32_0 : i32
    scf.if %2 {
      %cst_41 = arith.constant 0xFF800000 : f32
      %71 = vector.broadcast %cst_41 : f32 to vector<1x128xf32>
      %c0_42 = arith.constant 0 : index
      %c0_43 = arith.constant 0 : index
      %72 = vector.load %arg7[%c0_42, %c0_43] : memref<1x128xf32, #tpu.memory_space<vmem>>, vector<1x128xf32>
      tpu.vector_store %arg7[%c0_42, %c0_43], %71 {strides = array<i32>} : memref<1x128xf32, #tpu.memory_space<vmem>>, vector<1x128xf32>,
      %cst_44 = arith.constant 0xFF800000 : f32
      %73 = vector.broadcast %cst_44 : f32 to vector<1x128xf32>
      %c0_45 = arith.constant 0 : index
      %c0_46 = arith.constant 0 : index
      %74 = vector.load %arg9[%c0_45, %c0_46] : memref<1x128xf32, #tpu.memory_space<vmem>>, vector<1x128xf32>
      tpu.vector_store %arg9[%c0_45, %c0_46], %73 {strides = array<i32>} : memref<1x128xf32, #tpu.memory_space<vmem>>, vector<1x128xf32>,
      %cst_47 = arith.constant 0.000000e+00 : f32
      %75 = vector.broadcast %cst_47 : f32 to vector<1x128xf32>
      %c0_48 = arith.constant 0 : index
      %c0_49 = arith.constant 0 : index
      %76 = vector.load %arg8[%c0_48, %c0_49] : memref<1x128xf32, #tpu.memory_space<vmem>>, vector<1x128xf32>
      tpu.vector_store %arg8[%c0_48, %c0_49], %75 {strides = array<i32>} : memref<1x128xf32, #tpu.memory_space<vmem>>, vector<1x128xf32>,
      %cst_50 = arith.constant 0.000000e+00 : f32
      %77 = vector.broadcast %cst_50 : f32 to vector<1x128xf32>
      %c0_51 = arith.constant 0 : index
      %c0_52 = arith.constant 0 : index
      %78 = vector.load %arg10[%c0_51, %c0_52] : memref<1x128xf32, #tpu.memory_space<vmem>>, vector<1x128xf32>
      tpu.vector_store %arg10[%c0_51, %c0_52], %77 {strides = array<i32>} : memref<1x128xf32, #tpu.memory_space<vmem>>, vector<1x128xf32>,
    } else {
    }
    %c128_i32 = arith.constant 128 : i32
    %3 = arith.muli %arg1, %c128_i32 : i32
    %4 = tpu.assume_multiple %3, 128 : i32
    %c128_i32_1 = arith.constant 128 : i32
    %5 = arith.muli %arg0, %c128_i32_1 : i32
    %6 = tpu.assume_multiple %5, 128 : i32
    %c0 = arith.constant 0 : index
    %c0_2 = arith.constant 0 : index
    %7 = vector.load %arg4[%c0, %c0_2] : memref<128x128xf32, #tpu.memory_space<vmem>>, vector<128x128xf32>
    %c0_3 = arith.constant 0 : index
    %c0_4 = arith.constant 0 : index
    %8 = vector.load %arg5[%c0_3, %c0_4] : memref<128x128xf32, #tpu.memory_space<vmem>>, vector<128x128xf32>
    %cst = arith.constant dense<0.000000e+00> : vector<128x128xf32>
    %9 = tpu.matmul %7, %8, %cst {dimension_numbers = #tpu.dot_dimension_numbers<[1], [1], [0], [0], [0, 0, 1, 0], [], []>} : vector<128x128xf32>, vector<128x128xf32>, vector<128x128xf32> -> vector<128x128xf32>
    %10 = tpu.iota {dimensions = array<i32: 0>} : vector<128x128xi32>
    %11 = vector.broadcast %4 : i32 to vector<128x128xi32>
    %12 = arith.addi %10, %11 : vector<128x128xi32>
    %13 = tpu.iota {dimensions = array<i32: 1>} : vector<128x128xi32>
    %14 = vector.broadcast %6 : i32 to vector<128x128xi32>
    %15 = arith.addi %13, %14 : vector<128x128xi32>
    %c0_5 = arith.constant 0 : index
    %c0_6 = arith.constant 0 : index
    %16 = vector.load %arg2[%c0_5, %c0_6] : memref<128x1xi32, #tpu.memory_space<vmem>>, vector<128x1xi32>
    %c0_7 = arith.constant 0 : index
    %c0_8 = arith.constant 0 : index
    %17 = vector.load %arg3[%c0_7, %c0_8] : memref<1x128xi32, #tpu.memory_space<vmem>>, vector<1x128xi32>
    %18 = vector.broadcast %16 : vector<128x1xi32> to vector<128x128xi32>
    %19 = vector.broadcast %17 : vector<1x128xi32> to vector<128x128xi32>
    %20 = arith.cmpi eq, %18, %19 : vector<128x128xi32>
    %21 = arith.cmpi eq, %12, %15 : vector<128x128xi32>
    %cst_9 = arith.constant dense<true> : vector<128x128xi1>
    %22 = arith.xori %20, %cst_9 : vector<128x128xi1>
    %23 = arith.ori %22, %21 : vector<128x128xi1>
    %cst_10 = arith.constant 0.999899983 : f32
    %24 = vector.broadcast %cst_10 : f32 to vector<128x128xf32>
    %25 = arith.cmpf ogt, %9, %24 : vector<128x128xf32>
    %26 = arith.ori %23, %25 : vector<128x128xi1>
    %c8_i32 = arith.constant 8 : i32
    %27 = vector.broadcast %c8_i32 : i32 to vector<128x128xi32>
    %28 = arith.cmpi sge, %12, %27 : vector<128x128xi32>
    %29 = arith.ori %26, %28 : vector<128x128xi1>
    %30 = arith.ori %20, %28 : vector<128x128xi1>
    %cst_11 = arith.constant -1.000000e+00 : f32
    %31 = vector.broadcast %cst_11 : f32 to vector<128x128xf32>
    %32 = arith.select %29, %31, %9 : vector<128x128xi1>, vector<128x128xf32>
    %cst_12 = arith.constant -1.000000e+00 : f32
    %33 = vector.broadcast %cst_12 : f32 to vector<128x128xf32>
    %34 = arith.select %30, %33, %9 : vector<128x128xi1>, vector<128x128xf32>
    %35 = arith.sitofp %12 : vector<128x128xi32> to vector<128x128xf32>
    %cst_13 = arith.constant dense<0xFF800000> : vector<128xf32>
    %36 = vector.multi_reduction <maximumf>, %32, %cst_13 [0] : vector<128x128xf32> to vector<128xf32>
    %37 = vector.shape_cast %36 : vector<128xf32> to vector<1x128xf32>
    %c0_14 = arith.constant 0 : index
    %c0_15 = arith.constant 0 : index
    %38 = vector.load %arg7[%c0_14, %c0_15] : memref<1x128xf32, #tpu.memory_space<vmem>>, vector<1x128xf32>
    %39 = arith.cmpf ogt, %37, %38 : vector<1x128xf32>
    %40 = vector.broadcast %37 : vector<1x128xf32> to vector<128x128xf32>
    %41 = arith.cmpf oeq, %32, %40 : vector<128x128xf32>
    %cst_16 = arith.constant 1.280000e+02 : f32
    %42 = vector.broadcast %cst_16 : f32 to vector<128x128xf32>
    %43 = arith.select %41, %35, %42 : vector<128x128xi1>, vector<128x128xf32>
    %cst_17 = arith.constant dense<0x7F800000> : vector<128xf32>
    %44 = vector.multi_reduction <minimumf>, %43, %cst_17 [0] : vector<128x128xf32> to vector<128xf32>
    %45 = vector.shape_cast %44 : vector<128xf32> to vector<1x128xf32>
    %c0_18 = arith.constant 0 : index
    %c0_19 = arith.constant 0 : index
    %46 = vector.load %arg8[%c0_18, %c0_19] : memref<1x128xf32, #tpu.memory_space<vmem>>, vector<1x128xf32>
    %47 = arith.select %39, %45, %46 : vector<1x128xi1>, vector<1x128xf32>
    %c0_20 = arith.constant 0 : index
    %c0_21 = arith.constant 0 : index
    %48 = vector.load %arg8[%c0_20, %c0_21] : memref<1x128xf32, #tpu.memory_space<vmem>>, vector<1x128xf32>
    tpu.vector_store %arg8[%c0_20, %c0_21], %47 {strides = array<i32>} : memref<1x128xf32, #tpu.memory_space<vmem>>, vector<1x128xf32>,
    %c0_22 = arith.constant 0 : index
    %c0_23 = arith.constant 0 : index
    %49 = vector.load %arg7[%c0_22, %c0_23] : memref<1x128xf32, #tpu.memory_space<vmem>>, vector<1x128xf32>
    %50 = arith.select %39, %37, %49 : vector<1x128xi1>, vector<1x128xf32>
    %c0_24 = arith.constant 0 : index
    %c0_25 = arith.constant 0 : index
    %51 = vector.load %arg7[%c0_24, %c0_25] : memref<1x128xf32, #tpu.memory_space<vmem>>, vector<1x128xf32>
    tpu.vector_store %arg7[%c0_24, %c0_25], %50 {strides = array<i32>} : memref<1x128xf32, #tpu.memory_space<vmem>>, vector<1x128xf32>,
    %cst_26 = arith.constant dense<0xFF800000> : vector<128xf32>
    %52 = vector.multi_reduction <maximumf>, %34, %cst_26 [0] : vector<128x128xf32> to vector<128xf32>
    %53 = vector.shape_cast %52 : vector<128xf32> to vector<1x128xf32>
    %c0_27 = arith.constant 0 : index
    %c0_28 = arith.constant 0 : index
    %54 = vector.load %arg9[%c0_27, %c0_28] : memref<1x128xf32, #tpu.memory_space<vmem>>, vector<1x128xf32>
    %55 = arith.cmpf ogt, %53, %54 : vector<1x128xf32>
    %56 = vector.broadcast %53 : vector<1x128xf32> to vector<128x128xf32>
    %57 = arith.cmpf oeq, %34, %56 : vector<128x128xf32>
    %cst_29 = arith.constant 1.280000e+02 : f32
    %58 = vector.broadcast %cst_29 : f32 to vector<128x128xf32>
    %59 = arith.select %57, %35, %58 : vector<128x128xi1>, vector<128x128xf32>
    %cst_30 = arith.constant dense<0x7F800000> : vector<128xf32>
    %60 = vector.multi_reduction <minimumf>, %59, %cst_30 [0] : vector<128x128xf32> to vector<128xf32>
    %61 = vector.shape_cast %60 : vector<128xf32> to vector<1x128xf32>
    %c0_31 = arith.constant 0 : index
    %c0_32 = arith.constant 0 : index
    %62 = vector.load %arg10[%c0_31, %c0_32] : memref<1x128xf32, #tpu.memory_space<vmem>>, vector<1x128xf32>
    %63 = arith.select %55, %61, %62 : vector<1x128xi1>, vector<1x128xf32>
    %c0_33 = arith.constant 0 : index
    %c0_34 = arith.constant 0 : index
    %64 = vector.load %arg10[%c0_33, %c0_34] : memref<1x128xf32, #tpu.memory_space<vmem>>, vector<1x128xf32>
    tpu.vector_store %arg10[%c0_33, %c0_34], %63 {strides = array<i32>} : memref<1x128xf32, #tpu.memory_space<vmem>>, vector<1x128xf32>,
    %c0_35 = arith.constant 0 : index
    %c0_36 = arith.constant 0 : index
    %65 = vector.load %arg9[%c0_35, %c0_36] : memref<1x128xf32, #tpu.memory_space<vmem>>, vector<1x128xf32>
    %66 = arith.select %55, %53, %65 : vector<1x128xi1>, vector<1x128xf32>
    %c0_37 = arith.constant 0 : index
    %c0_38 = arith.constant 0 : index
    %67 = vector.load %arg9[%c0_37, %c0_38] : memref<1x128xf32, #tpu.memory_space<vmem>>, vector<1x128xf32>
    tpu.vector_store %arg9[%c0_37, %c0_38], %66 {strides = array<i32>} : memref<1x128xf32, #tpu.memory_space<vmem>>, vector<1x128xf32>,
    %c0_i32_39 = arith.constant 0 : i32
    %68 = arith.cmpi eq, %arg1, %c0_i32_39 : i32
    %69 = arith.extui %68 : i1 to i32
    %c0_i32_40 = arith.constant 0 : i32
    %70 = arith.cmpi ne, %69, %c0_i32_40 : i32
    scf.if %70 {
      %c0_41 = arith.constant 0 : index
      %c0_42 = arith.constant 0 : index
      %71 = vector.load %arg7[%c0_41, %c0_42] : memref<1x128xf32, #tpu.memory_space<vmem>>, vector<1x128xf32>
      %c0_43 = arith.constant 0 : index
      %c0_44 = arith.constant 0 : index
      %72 = vector.load %arg6[%c0_43, %c0_44] : memref<4x128xf32, #tpu.memory_space<vmem>>, vector<1x128xf32>
      tpu.vector_store %arg6[%c0_43, %c0_44], %71 {strides = array<i32>} : memref<4x128xf32, #tpu.memory_space<vmem>>, vector<1x128xf32>,
      %c0_45 = arith.constant 0 : index
      %c0_46 = arith.constant 0 : index
      %73 = vector.load %arg9[%c0_45, %c0_46] : memref<1x128xf32, #tpu.memory_space<vmem>>, vector<1x128xf32>
      %c1 = arith.constant 1 : index
      %c0_47 = arith.constant 0 : index
      %74 = vector.load %arg6[%c1, %c0_47] : memref<4x128xf32, #tpu.memory_space<vmem>>, vector<1x128xf32>
      tpu.vector_store %arg6[%c1, %c0_47], %73 {strides = array<i32>} : memref<4x128xf32, #tpu.memory_space<vmem>>, vector<1x128xf32>,
      %c0_48 = arith.constant 0 : index
      %c0_49 = arith.constant 0 : index
      %75 = vector.load %arg8[%c0_48, %c0_49] : memref<1x128xf32, #tpu.memory_space<vmem>>, vector<1x128xf32>
      %c2 = arith.constant 2 : index
      %c0_50 = arith.constant 0 : index
      %76 = vector.load %arg6[%c2, %c0_50] : memref<4x128xf32, #tpu.memory_space<vmem>>, vector<1x128xf32>
      tpu.vector_store %arg6[%c2, %c0_50], %75 {strides = array<i32>} : memref<4x128xf32, #tpu.memory_space<vmem>>, vector<1x128xf32>,
      %c0_51 = arith.constant 0 : index
      %c0_52 = arith.constant 0 : index
      %77 = vector.load %arg10[%c0_51, %c0_52] : memref<1x128xf32, #tpu.memory_space<vmem>>, vector<1x128xf32>
      %c3 = arith.constant 3 : index
      %c0_53 = arith.constant 0 : index
      %78 = vector.load %arg6[%c3, %c0_53] : memref<4x128xf32, #tpu.memory_space<vmem>>, vector<1x128xf32>
      tpu.vector_store %arg6[%c3, %c0_53], %77 {strides = array<i32>} : memref<4x128xf32, #tpu.memory_space<vmem>>, vector<1x128xf32>,
    } else {
    }
    return
  }
  func.func @transform_0(%arg0: i32, %arg1: i32) -> (i32, i32) {
    %c0_i32 = arith.constant 0 : i32
    %c0_i32_0 = arith.constant 0 : i32
    return %arg1, %c0_i32 : i32, i32
  }
  func.func @transform_1(%arg0: i32, %arg1: i32) -> (i32, i32) {
    %c0_i32 = arith.constant 0 : i32
    %c0_i32_0 = arith.constant 0 : i32
    return %c0_i32, %arg0 : i32, i32
  }
  func.func @transform_2(%arg0: i32, %arg1: i32) -> (i32, i32) {
    %c0_i32 = arith.constant 0 : i32
    %c0_i32_0 = arith.constant 0 : i32
    return %arg1, %c0_i32 : i32, i32
  }
  func.func @transform_3(%arg0: i32, %arg1: i32) -> (i32, i32) {
    %c0_i32 = arith.constant 0 : i32
    %c0_i32_0 = arith.constant 0 : i32
    return %arg0, %c0_i32 : i32, i32
  }
  func.func @transform_4(%arg0: i32, %arg1: i32) -> (i32, i32) {
    %c0_i32 = arith.constant 0 : i32
    %c0_i32_0 = arith.constant 0 : i32
    return %c0_i32, %arg0 : i32, i32
  }
}

</mosaic_0001>

<llo_original>
// kernel: tpu_custom_call.1
$region0: #{tpu_custom_call.1}
  #allocation0 [shape = 'u32[]', space=smem, size = 0x4, offset = 0x4, fixed_abs, tag = 'smem constant byte address 0x4 - core index']
  #allocation1 [shape = 'u32[144,128]{1,0:T(1,128)}', space=vmem, size = 0x12000, scoped, tag = 'internal scratch']
  #allocation2 [shape = 'f32[1,128]{1,0:T(1,128)}', space=vmem, size = 0x200, scoped, tag = 'scratch operand']
  #allocation3 [shape = 'f32[1,128]{1,0:T(1,128)}', space=vmem, size = 0x200, scoped, tag = 'scratch operand']
  #allocation4 [shape = 'f32[1,128]{1,0:T(1,128)}', space=vmem, size = 0x200, scoped, tag = 'scratch operand']
  #allocation5 [shape = 'f32[1,128]{1,0:T(1,128)}', space=vmem, size = 0x200, scoped, tag = 'scratch operand']
  %s0 = inlined_call_operand.vmem [shape: s32[128,1], index: 0, kind: input, shape index: {}]
  %s1 = inlined_call_operand.vmem [shape: s32[1,128], index: 1, kind: input, shape index: {}]
  %s2 = inlined_call_operand.vmem [shape: f32[128,128], index: 2, kind: input, shape index: {}]
  %s3 = inlined_call_operand.hbm [shape: f32[128,128], index: 3, kind: input, shape index: {}]
  %s4 = inlined_call_operand.hbm [shape: f32[4,128], index: 4, kind: output, shape index: {}]
  %s5 = sld [smem:[#allocation0]]
  $region38: #{tpu_custom_call.1} parent=0
    _
  %s7 = ssub.s32 1, %s5
  %s8 = scalar_select 0, %s7, %s5
  $region1: #{tpu_custom_call.1} parent=0
    #allocation6 [shape = 'u8[65536]{0}', space=vmem, size = 0x10000, scoped, tag = 'input window, operand 3, single buffered']
    #allocation7 [shape = 's32[1]{0}', space=sflag, size = 0x4, scoped, tag = 'scoped memory for tpu_custom_call.1']
    #allocation8 [shape = 's32[1]{0}', space=sflag, size = 0x4, scoped, tag = 'scoped memory for tpu_custom_call.1']
    #allocation9 [shape = 'u8[2048]{0}', space=vmem, size = 0x800, scoped, tag = 'output window, operand 0, single buffered']
    %9 = vsyncpa [#allocation7], 0
    %10 = vsyncpa [#allocation8], 0
    // Predicated region
    $region2: #{tpu_custom_call.1} parent=1 // pred_check
      _
    $region3: #{tpu_custom_call.1} parent=1 // pred_check_branch
      %12 = sbr.rel (0) target = $region5
    $region4: #{tpu_custom_call.1} parent=1 // pred_region
      _
    $region5: #{tpu_custom_call.1} parent=1 // pred_fallthru
      _
    // Predicated region
    $region6: #{tpu_custom_call.1} parent=1 // pred_check
      _
    $region7: #{tpu_custom_call.1} parent=1 // pred_check_branch
      %14 = sbr.rel (0) target = $region9
    $region8: #{tpu_custom_call.1} parent=1 // pred_region
      _
    $region9: #{tpu_custom_call.1} parent=1 // pred_fallthru
      _
    // Predicated region
    $region10: #{tpu_custom_call.1} parent=1 // pred_check
      _
    $region11: #{tpu_custom_call.1} parent=1 // pred_check_branch
      %16 = sbr.rel (0) target = $region13
    $region12: #{tpu_custom_call.1} parent=1 // pred_region
      _
    $region13: #{tpu_custom_call.1} parent=1 // pred_fallthru
      _
    // Predicated region
    $region14: #{tpu_custom_call.1} parent=1 // pred_check
      _
    $region15: #{tpu_custom_call.1} parent=1 // pred_check_branch
      %18 = sbr.rel (0) target = $region17
    $region16: #{tpu_custom_call.1} parent=1 // pred_region
      %s20 = ssub.s32 2048, 2048
      %21 = vsyncadd [#allocation7], %s20
      %s22 = sshll.u32 [#allocation6], 4
      %s23 = int_to_ptr.vmem [resolvable:$true] %s22
      %28 = dma.hbm_to_vmem [thread:$0]  %s3, 2048, %s23, [#allocation7], 128, 128, 8
    $region17: #{tpu_custom_call.1} parent=1 // pred_fallthru
      _
    // Predicated region
    $region18: #{tpu_custom_call.1} parent=1 // pred_check
      _
    $region19: #{tpu_custom_call.1} parent=1 // pred_check_branch
      %30 = sbr.rel (0) target = $region21
    $region20: #{tpu_custom_call.1} parent=1 // pred_region
      %31 = dma.done [#allocation7], 2048
    $region21: #{tpu_custom_call.1} parent=1 // pred_fallthru
      _
    %p32 = scmp.eq.s32.totalorder 0, 0
    // Predicated region
    $region22: #{tpu_custom_call.1} parent=1 // pred_check
      %p33 = pneg %p32
    $region23: #{tpu_custom_call.1} parent=1 // pred_check_branch
      %35 = sbr.rel (%p33) target = $region25
    $region24: #{tpu_custom_call.1} parent=1 // pred_region
      %36 = vst [vmem:[#allocation2] sm:$0x1] -inf
      %37 = vst [vmem:[#allocation4] sm:$0x1] -inf
      %38 = vst [vmem:[#allocation3] sm:$0x1] 0.0
      %39 = vst [vmem:[#allocation5] sm:$0x1] 0.0
    $region25: #{tpu_custom_call.1} parent=1 // pred_fallthru
      _
    %s40 = smul.u32 0, 128
    %s41 = smul.u32 0, 128
    %v42 = vld [vmem:[%s2] sm:$0xff]
    %v43 = vld [vmem:[%s2 + $0x8] sm:$0xff]
    %v44 = vld [vmem:[%s2 + $0x10] sm:$0xff]
    %v45 = vld [vmem:[%s2 + $0x18] sm:$0xff]
    %v46 = vld [vmem:[%s2 + $0x20] sm:$0xff]
    %v47 = vld [vmem:[%s2 + $0x28] sm:$0xff]
    %v48 = vld [vmem:[%s2 + $0x30] sm:$0xff]
    %v49 = vld [vmem:[%s2 + $0x38] sm:$0xff]
    %v50 = vld [vmem:[%s2 + $0x40] sm:$0xff]
    %v51 = vld [vmem:[%s2 + $0x48] sm:$0xff]
    %v52 = vld [vmem:[%s2 + $0x50] sm:$0xff]
    %v53 = vld [vmem:[%s2 + $0x58] sm:$0xff]
    %v54 = vld [vmem:[%s2 + $0x60] sm:$0xff]
    %v55 = vld [vmem:[%s2 + $0x68] sm:$0xff]
    %v56 = vld [vmem:[%s2 + $0x70] sm:$0xff]
    %v57 = vld [vmem:[%s2 + $0x78] sm:$0xff]
    %v58 = vld [vmem:[#allocation6] sm:$0xff]
    %v59 = vld [vmem:[#allocation6 + $0x8] sm:$0xff]
    %v60 = vld [vmem:[#allocation6 + $0x10] sm:$0xff]
    %v61 = vld [vmem:[#allocation6 + $0x18] sm:$0xff]
    %v62 = vld [vmem:[#allocation6 + $0x20] sm:$0xff]
    %v63 = vld [vmem:[#allocation6 + $0x28] sm:$0xff]
    %v64 = vld [vmem:[#allocation6 + $0x30] sm:$0xff]
    %v65 = vld [vmem:[#allocation6 + $0x38] sm:$0xff]
    %v66 = vld [vmem:[#allocation6 + $0x40] sm:$0xff]
    %v67 = vld [vmem:[#allocation6 + $0x48] sm:$0xff]
    %v68 = vld [vmem:[#allocation6 + $0x50] sm:$0xff]
    %v69 = vld [vmem:[#allocation6 + $0x58] sm:$0xff]
    %v70 = vld [vmem:[#allocation6 + $0x60] sm:$0xff]
    %v71 = vld [vmem:[#allocation6 + $0x68] sm:$0xff]
    %v72 = vld [vmem:[#allocation6 + $0x70] sm:$0xff]
    %v73 = vld [vmem:[#allocation6 + $0x78] sm:$0xff]
    %74 = vmatprep.subr.mxu0 0.0
    %75 = vmatpush1.xpose.msra.mxu0 %v73
    %76 = vmatprep.subr.mxu0 0.0
    %77 = vmatpush1.xpose.msra.mxu0 %v72
    %78 = vmatprep.subr.mxu0 0.0
    %79 = vmatpush1.xpose.msra.mxu0 %v71
    %80 = vmatprep.subr.mxu0 0.0
    %81 = vmatpush1.xpose.msra.mxu0 %v70
    %82 = vmatprep.subr.mxu0 0.0
    %83 = vmatpush1.xpose.msra.mxu0 %v69
    %84 = vmatprep.subr.mxu0 0.0
    %85 = vmatpush1.xpose.msra.mxu0 %v68
    %86 = vmatprep.subr.mxu0 0.0
    %87 = vmatpush1.xpose.msra.mxu0 %v67
    %88 = vmatprep.subr.mxu0 0.0
    %89 = vmatpush1.xpose.msra.mxu0 %v66
    %90 = vmatprep.subr.mxu0 0.0
    %91 = vmatpush1.xpose.msra.mxu0 %v65
    %92 = vmatprep.subr.mxu0 0.0
    %93 = vmatpush1.xpose.msra.mxu0 %v64
    %94 = vmatprep.subr.mxu0 0.0
    %95 = vmatpush1.xpose.msra.mxu0 %v63
    %96 = vmatprep.subr.mxu0 0.0
    %97 = vmatpush1.xpose.msra.mxu0 %v62
    %98 = vmatprep.subr.mxu0 0.0
    %99 = vmatpush1.xpose.msra.mxu0 %v61
    %100 = vmatprep.subr.mxu0 0.0
    %101 = vmatpush1.xpose.msra.mxu0 %v60
    %102 = vmatprep.subr.mxu0 0.0
    %103 = vmatpush1.xpose.msra.mxu0 %v59
    %104 = vmatprep.subr.mxu0 0.0
    %105 = vmatpush1.xpose.msra.mxu0 %v58
    %106 = vmatprep.subr.mxu0 0.0
    %107 = vmatpush2.xpose.msra.mxu0 0.0
    %108 = vmatprep.subr.mxu0 0.0
    %109 = vmatpush2.xpose.msra.mxu0 0.0
    %110 = vmatprep.subr.mxu0 0.0
    %111 = vmatpush2.xpose.msra.mxu0 0.0
    %112 = vmatprep.subr.mxu0 0.0
    %113 = vmatpush2.xpose.msra.mxu0 0.0
    %114 = vmatprep.subr.mxu0 0.0
    %115 = vmatpush2.xpose.msra.mxu0 0.0
    %116 = vmatprep.subr.mxu0 0.0
    %117 = vmatpush2.xpose.msra.mxu0 0.0
    %118 = vmatprep.subr.mxu0 0.0
    %119 = vmatpush2.xpose.msra.mxu0 0.0
    %120 = vmatprep.subr.mxu0 0.0
    %121 = vmatpush2.xpose.msra.mxu0 0.0
    %122 = vmatprep.subr.mxu0 0.0
    %123 = vmatpush2.xpose.msra.mxu0 0.0
    %124 = vmatprep.subr.mxu0 0.0
    %125 = vmatpush2.xpose.msra.mxu0 0.0
    %126 = vmatprep.subr.mxu0 0.0
    %127 = vmatpush2.xpose.msra.mxu0 0.0
    %128 = vmatprep.subr.mxu0 0.0
    %129 = vmatpush2.xpose.msra.mxu0 0.0
    %130 = vmatprep.subr.mxu0 0.0
    %131 = vmatpush2.xpose.msra.mxu0 0.0
    %132 = vmatprep.subr.mxu0 0.0
    %133 = vmatpush2.xpose.msra.mxu0 0.0
    %134 = vmatprep.subr.mxu0 0.0
    %135 = vmatpush2.xpose.msra.mxu0 0.0
    %136 = vmatprep.subr.mxu0 0.0
    %137 = vmatpush2.xpose.msra.mxu0 0.0
    %138 = vmatprep.mubr.f32.mxu0 0.0
    %139 = vmatmul.mubr.f32.gmra.mxu0 %v42
    %v140 = vpop.f32.mrf.mxu0
    %v141 = vadd.f32 0.0, %v140
    %v142 = vpop.f32.mrf.mxu0
    %143 = vmatprep.mubr.f32.mxu0 0.0
    %144 = vmatmul.mubr.f32.gmra.mxu0 %v43
    %v145 = vpop.f32.mrf.mxu0
    %v146 = vadd.f32 0.0, %v145
    %v147 = vpop.f32.mrf.mxu0
    %148 = vmatprep.mubr.f32.mxu0 0.0
    %149 = vmatmul.mubr.f32.gmra.mxu0 %v44
    %v150 = vpop.f32.mrf.mxu0
    %v151 = vadd.f32 0.0, %v150
    %v152 = vpop.f32.mrf.mxu0
    %153 = vmatprep.mubr.f32.mxu0 0.0
    %154 = vmatmul.mubr.f32.gmra.mxu0 %v45
    %v155 = vpop.f32.mrf.mxu0
    %v156 = vadd.f32 0.0, %v155
    %v157 = vpop.f32.mrf.mxu0
    %158 = vmatprep.mubr.f32.mxu0 0.0
    %159 = vmatmul.mubr.f32.gmra.mxu0 %v46
    %v160 = vpop.f32.mrf.mxu0
    %v161 = vadd.f32 0.0, %v160
    %v162 = vpop.f32.mrf.mxu0
    %163 = vmatprep.mubr.f32.mxu0 0.0
    %164 = vmatmul.mubr.f32.gmra.mxu0 %v47
    %v165 = vpop.f32.mrf.mxu0
    %v166 = vadd.f32 0.0, %v165
    %v167 = vpop.f32.mrf.mxu0
    %168 = vmatprep.mubr.f32.mxu0 0.0
    %169 = vmatmul.mubr.f32.gmra.mxu0 %v48
    %v170 = vpop.f32.mrf.mxu0
    %v171 = vadd.f32 0.0, %v170
    %v172 = vpop.f32.mrf.mxu0
    %173 = vmatprep.mubr.f32.mxu0 0.0
    %174 = vmatmul.mubr.f32.gmra.mxu0 %v49
    %v175 = vpop.f32.mrf.mxu0
    %v176 = vadd.f32 0.0, %v175
    %v177 = vpop.f32.mrf.mxu0
    %178 = vmatprep.mubr.f32.mxu0 0.0
    %179 = vmatmul.mubr.f32.gmra.mxu0 %v50
    %v180 = vpop.f32.mrf.mxu0
    %v181 = vadd.f32 0.0, %v180
    %v182 = vpop.f32.mrf.mxu0
    %183 = vmatprep.mubr.f32.mxu0 0.0
    %184 = vmatmul.mubr.f32.gmra.mxu0 %v51
    %v185 = vpop.f32.mrf.mxu0
    %v186 = vadd.f32 0.0, %v185
    %v187 = vpop.f32.mrf.mxu0
    %188 = vmatprep.mubr.f32.mxu0 0.0
    %189 = vmatmul.mubr.f32.gmra.mxu0 %v52
    %v190 = vpop.f32.mrf.mxu0
    %v191 = vadd.f32 0.0, %v190
    %v192 = vpop.f32.mrf.mxu0
    %193 = vmatprep.mubr.f32.mxu0 0.0
    %194 = vmatmul.mubr.f32.gmra.mxu0 %v53
    %v195 = vpop.f32.mrf.mxu0
    %v196 = vadd.f32 0.0, %v195
    %v197 = vpop.f32.mrf.mxu0
    %198 = vmatprep.mubr.f32.mxu0 0.0
    %199 = vmatmul.mubr.f32.gmra.mxu0 %v54
    %v200 = vpop.f32.mrf.mxu0
    %v201 = vadd.f32 0.0, %v200
    %v202 = vpop.f32.mrf.mxu0
    %203 = vmatprep.mubr.f32.mxu0 0.0
    %204 = vmatmul.mubr.f32.gmra.mxu0 %v55
    %v205 = vpop.f32.mrf.mxu0
    %v206 = vadd.f32 0.0, %v205
    %v207 = vpop.f32.mrf.mxu0
    %208 = vmatprep.mubr.f32.mxu0 0.0
    %209 = vmatmul.mubr.f32.gmra.mxu0 %v56
    %v210 = vpop.f32.mrf.mxu0
    %v211 = vadd.f32 0.0, %v210
    %v212 = vpop.f32.mrf.mxu0
    %213 = vmatprep.mubr.f32.mxu0 0.0
    %214 = vmatmul.mubr.f32.gmra.mxu0 %v57
    %v215 = vpop.f32.mrf.mxu0
    %v216 = vadd.f32 0.0, %v215
    %v217 = vpop.f32.mrf.mxu0
    %218 = vdwg.mxu0
    %v219 = vlaneseq
    %v220 = vshrl.u32 %v219, 7
    %v221 = vadd.s32 %v220, 8
    %v222 = vadd.s32 %v220, 16
    %v223 = vadd.s32 %v220, 24
    %v224 = vadd.s32 %v220, 32
    %v225 = vadd.s32 %v220, 40
    %v226 = vadd.s32 %v220, 48
    %v227 = vadd.s32 %v220, 56
    %v228 = vadd.s32 %v220, 64
    %v229 = vadd.s32 %v220, 72
    %v230 = vadd.s32 %v220, 80
    %v231 = vadd.s32 %v220, 88
    %v232 = vadd.s32 %v220, 96
    %v233 = vadd.s32 %v220, 104
    %v234 = vadd.s32 %v220, 112
    %v235 = vadd.s32 %v220, 120
    %v236 = vstv %s40
    %v237 = vadd.s32 %v220, %v236
    %v238 = vadd.s32 %v221, %v236
    %v239 = vadd.s32 %v222, %v236
    %v240 = vadd.s32 %v223, %v236
    %v241 = vadd.s32 %v224, %v236
    %v242 = vadd.s32 %v225, %v236
    %v243 = vadd.s32 %v226, %v236
    %v244 = vadd.s32 %v227, %v236
    %v245 = vadd.s32 %v228, %v236
    %v246 = vadd.s32 %v229, %v236
    %v247 = vadd.s32 %v230, %v236
    %v248 = vadd.s32 %v231, %v236
    %v249 = vadd.s32 %v232, %v236
    %v250 = vadd.s32 %v233, %v236
    %v251 = vadd.s32 %v234, %v236
    %v252 = vadd.s32 %v235, %v236
    %v253 = vlaneseq
    %v254 = vand.u32 %v253, 127
    %v255 = vstv %s41
    %v256 = vadd.s32 %v254, %v255
    %v257 = vld [vmem:[%s0] sm:$0xff]
    %v258 = vld [vmem:[%s0 + $0x8] sm:$0xff]
    %v259 = vld [vmem:[%s0 + $0x10] sm:$0xff]
    %v260 = vld [vmem:[%s0 + $0x18] sm:$0xff]
    %v261 = vld [vmem:[%s0 + $0x20] sm:$0xff]
    %v262 = vld [vmem:[%s0 + $0x28] sm:$0xff]
    %v263 = vld [vmem:[%s0 + $0x30] sm:$0xff]
    %v264 = vld [vmem:[%s0 + $0x38] sm:$0xff]
    %v265 = vld [vmem:[%s0 + $0x40] sm:$0xff]
    %v266 = vld [vmem:[%s0 + $0x48] sm:$0xff]
    %v267 = vld [vmem:[%s0 + $0x50] sm:$0xff]
    %v268 = vld [vmem:[%s0 + $0x58] sm:$0xff]
    %v269 = vld [vmem:[%s0 + $0x60] sm:$0xff]
    %v270 = vld [vmem:[%s0 + $0x68] sm:$0xff]
    %v271 = vld [vmem:[%s0 + $0x70] sm:$0xff]
    %v272 = vld [vmem:[%s0 + $0x78] sm:$0xff]
    %v273 = vld [vmem:[%s1] sm:$0x1]
    %274 = vset.pattern.permute.xlu0 0
    %275 = vperm.xlu0 %274, %v257
    %v276 = vpop.permute.xlu0 %275
    %277 = vset.pattern.permute.xlu0 0
    %278 = vperm.xlu0 %277, %v258
    %v279 = vpop.permute.xlu0 %278
    %280 = vset.pattern.permute.xlu0 0
    %281 = vperm.xlu0 %280, %v259
    %v282 = vpop.permute.xlu0 %281
    %283 = vset.pattern.permute.xlu0 0
    %284 = vperm.xlu0 %283, %v260
    %v285 = vpop.permute.xlu0 %284
    %286 = vset.pattern.permute.xlu0 0
    %287 = vperm.xlu0 %286, %v261
    %v288 = vpop.permute.xlu0 %287
    %289 = vset.pattern.permute.xlu0 0
    %290 = vperm.xlu0 %289, %v262
    %v291 = vpop.permute.xlu0 %290
    %292 = vset.pattern.permute.xlu0 0
    %293 = vperm.xlu0 %292, %v263
    %v294 = vpop.permute.xlu0 %293
    %295 = vset.pattern.permute.xlu0 0
    %296 = vperm.xlu0 %295, %v264
    %v297 = vpop.permute.xlu0 %296
    %298 = vset.pattern.permute.xlu0 0
    %299 = vperm.xlu0 %298, %v265
    %v300 = vpop.permute.xlu0 %299
    %301 = vset.pattern.permute.xlu0 0
    %302 = vperm.xlu0 %301, %v266
    %v303 = vpop.permute.xlu0 %302
    %304 = vset.pattern.permute.xlu0 0
    %305 = vperm.xlu0 %304, %v267
    %v306 = vpop.permute.xlu0 %305
    %307 = vset.pattern.permute.xlu0 0
    %308 = vperm.xlu0 %307, %v268
    %v309 = vpop.permute.xlu0 %308
    %310 = vset.pattern.permute.xlu0 0
    %311 = vperm.xlu0 %310, %v269
    %v312 = vpop.permute.xlu0 %311
    %313 = vset.pattern.permute.xlu0 0
    %314 = vperm.xlu0 %313, %v270
    %v315 = vpop.permute.xlu0 %314
    %316 = vset.pattern.permute.xlu0 0
    %317 = vperm.xlu0 %316, %v271
    %v318 = vpop.permute.xlu0 %317
    %319 = vset.pattern.permute.xlu0 0
    %320 = vperm.xlu0 %319, %v272
    %v321 = vpop.permute.xlu0 %320
    %v322 = vlaneseq
    %v323 = vshrl.u32 %v322, 7
    %v324 = vsub.s32 0, %v323
    %v325 = vrot.slane %v273, %v324
    %vm326 = vcmp.eq.s32.totalorder %v276, %v325
    %vm327 = vcmp.eq.s32.totalorder %v279, %v325
    %vm328 = vcmp.eq.s32.totalorder %v282, %v325
    %vm329 = vcmp.eq.s32.totalorder %v285, %v325
    %vm330 = vcmp.eq.s32.totalorder %v288, %v325
    %vm331 = vcmp.eq.s32.totalorder %v291, %v325
    %vm332 = vcmp.eq.s32.totalorder %v294, %v325
    %vm333 = vcmp.eq.s32.totalorder %v297, %v325
    %vm334 = vcmp.eq.s32.totalorder %v300, %v325
    %vm335 = vcmp.eq.s32.totalorder %v303, %v325
    %vm336 = vcmp.eq.s32.totalorder %v306, %v325
    %vm337 = vcmp.eq.s32.totalorder %v309, %v325
    %vm338 = vcmp.eq.s32.totalorder %v312, %v325
    %vm339 = vcmp.eq.s32.totalorder %v315, %v325
    %vm340 = vcmp.eq.s32.totalorder %v318, %v325
    %vm341 = vcmp.eq.s32.totalorder %v321, %v325
    %vm342 = vcmp.eq.s32.totalorder %v237, %v256
    %vm343 = vcmp.eq.s32.totalorder %v238, %v256
    %vm344 = vcmp.eq.s32.totalorder %v239, %v256
    %vm345 = vcmp.eq.s32.totalorder %v240, %v256
    %vm346 = vcmp.eq.s32.totalorder %v241, %v256
    %vm347 = vcmp.eq.s32.totalorder %v242, %v256
    %vm348 = vcmp.eq.s32.totalorder %v243, %v256
    %vm349 = vcmp.eq.s32.totalorder %v244, %v256
    %vm350 = vcmp.eq.s32.totalorder %v245, %v256
    %vm351 = vcmp.eq.s32.totalorder %v246, %v256
    %vm352 = vcmp.eq.s32.totalorder %v247, %v256
    %vm353 = vcmp.eq.s32.totalorder %v248, %v256
    %vm354 = vcmp.eq.s32.totalorder %v249, %v256
    %vm355 = vcmp.eq.s32.totalorder %v250, %v256
    %vm356 = vcmp.eq.s32.totalorder %v251, %v256
    %vm357 = vcmp.eq.s32.totalorder %v252, %v256
    %vm358 = vmxor %vm326, 1
    %vm359 = vmxor %vm327, 1
    %vm360 = vmxor %vm328, 1
    %vm361 = vmxor %vm329, 1
    %vm362 = vmxor %vm330, 1
    %vm363 = vmxor %vm331, 1
    %vm364 = vmxor %vm332, 1
    %vm365 = vmxor %vm333, 1
    %vm366 = vmxor %vm334, 1
    %vm367 = vmxor %vm335, 1
    %vm368 = vmxor %vm336, 1
    %vm369 = vmxor %vm337, 1
    %vm370 = vmxor %vm338, 1
    %vm371 = vmxor %vm339, 1
    %vm372 = vmxor %vm340, 1
    %vm373 = vmxor %vm341, 1
    %vm374 = vmor %vm358, %vm342
    %vm375 = vmor %vm359, %vm343
    %vm376 = vmor %vm360, %vm344
    %vm377 = vmor %vm361, %vm345
    %vm378 = vmor %vm362, %vm346
    %vm379 = vmor %vm363, %vm347
    %vm380 = vmor %vm364, %vm348
    %vm381 = vmor %vm365, %vm349
    %vm382 = vmor %vm366, %vm350
    %vm383 = vmor %vm367, %vm351
    %vm384 = vmor %vm368, %vm352
    %vm385 = vmor %vm369, %vm353
    %vm386 = vmor %vm370, %vm354
    %vm387 = vmor %vm371, %vm355
    %vm388 = vmor %vm372, %vm356
    %vm389 = vmor %vm373, %vm357
    %vm390 = vcmp.gt.f32.partialorder %v141, 0.9999
    %vm391 = vcmp.gt.f32.partialorder %v146, 0.9999
    %vm392 = vcmp.gt.f32.partialorder %v151, 0.9999
    %vm393 = vcmp.gt.f32.partialorder %v156, 0.9999
    %vm394 = vcmp.gt.f32.partialorder %v161, 0.9999
    %vm395 = vcmp.gt.f32.partialorder %v166, 0.9999
    %vm396 = vcmp.gt.f32.partialorder %v171, 0.9999
    %vm397 = vcmp.gt.f32.partialorder %v176, 0.9999
    %vm398 = vcmp.gt.f32.partialorder %v181, 0.9999
    %vm399 = vcmp.gt.f32.partialorder %v186, 0.9999
    %vm400 = vcmp.gt.f32.partialorder %v191, 0.9999
    %vm401 = vcmp.gt.f32.partialorder %v196, 0.9999
    %vm402 = vcmp.gt.f32.partialorder %v201, 0.9999
    %vm403 = vcmp.gt.f32.partialorder %v206, 0.9999
    %vm404 = vcmp.gt.f32.partialorder %v211, 0.9999
    %vm405 = vcmp.gt.f32.partialorder %v216, 0.9999
    %vm406 = vmor %vm374, %vm390
    %vm407 = vmor %vm375, %vm391
    %vm408 = vmor %vm376, %vm392
    %vm409 = vmor %vm377, %vm393
    %vm410 = vmor %vm378, %vm394
    %vm411 = vmor %vm379, %vm395
    %vm412 = vmor %vm380, %vm396
    %vm413 = vmor %vm381, %vm397
    %vm414 = vmor %vm382, %vm398
    %vm415 = vmor %vm383, %vm399
    %vm416 = vmor %vm384, %vm400
    %vm417 = vmor %vm385, %vm401
    %vm418 = vmor %vm386, %vm402
    %vm419 = vmor %vm387, %vm403
    %vm420 = vmor %vm388, %vm404
    %vm421 = vmor %vm389, %vm405
    %vm422 = vcmp.ge.s32.totalorder %v237, 8
    %vm423 = vcmp.ge.s32.totalorder %v238, 8
    %vm424 = vcmp.ge.s32.totalorder %v239, 8
    %vm425 = vcmp.ge.s32.totalorder %v240, 8
    %vm426 = vcmp.ge.s32.totalorder %v241, 8
    %vm427 = vcmp.ge.s32.totalorder %v242, 8
    %vm428 = vcmp.ge.s32.totalorder %v243, 8
    %vm429 = vcmp.ge.s32.totalorder %v244, 8
    %vm430 = vcmp.ge.s32.totalorder %v245, 8
    %vm431 = vcmp.ge.s32.totalorder %v246, 8
    %vm432 = vcmp.ge.s32.totalorder %v247, 8
    %vm433 = vcmp.ge.s32.totalorder %v248, 8
    %vm434 = vcmp.ge.s32.totalorder %v249, 8
    %vm435 = vcmp.ge.s32.totalorder %v250, 8
    %vm436 = vcmp.ge.s32.totalorder %v251, 8
    %vm437 = vcmp.ge.s32.totalorder %v252, 8
    %vm438 = vmor %vm406, %vm422
    %vm439 = vmor %vm407, %vm423
    %vm440 = vmor %vm408, %vm424
    %vm441 = vmor %vm409, %vm425
    %vm442 = vmor %vm410, %vm426
    %vm443 = vmor %vm411, %vm427
    %vm444 = vmor %vm412, %vm428
    %vm445 = vmor %vm413, %vm429
    %vm446 = vmor %vm414, %vm430
    %vm447 = vmor %vm415, %vm431
    %vm448 = vmor %vm416, %vm432
    %vm449 = vmor %vm417, %vm433
    %vm450 = vmor %vm418, %vm434
    %vm451 = vmor %vm419, %vm435
    %vm452 = vmor %vm420, %vm436
    %vm453 = vmor %vm421, %vm437
    %vm454 = vmor %vm326, %vm422
    %vm455 = vmor %vm327, %vm423
    %vm456 = vmor %vm328, %vm424
    %vm457 = vmor %vm329, %vm425
    %vm458 = vmor %vm330, %vm426
    %vm459 = vmor %vm331, %vm427
    %vm460 = vmor %vm332, %vm428
    %vm461 = vmor %vm333, %vm429
    %vm462 = vmor %vm334, %vm430
    %vm463 = vmor %vm335, %vm431
    %vm464 = vmor %vm336, %vm432
    %vm465 = vmor %vm337, %vm433
    %vm466 = vmor %vm338, %vm434
    %vm467 = vmor %vm339, %vm435
    %vm468 = vmor %vm340, %vm436
    %vm469 = vmor %vm341, %vm437
    %v470 = vsel %vm438, -1.0, %v141
    %v471 = vsel %vm439, -1.0, %v146
    %v472 = vsel %vm440, -1.0, %v151
    %v473 = vsel %vm441, -1.0, %v156
    %v474 = vsel %vm442, -1.0, %v161
    %v475 = vsel %vm443, -1.0, %v166
    %v476 = vsel %vm444, -1.0, %v171
    %v477 = vsel %vm445, -1.0, %v176
    %v478 = vsel %vm446, -1.0, %v181
    %v479 = vsel %vm447, -1.0, %v186
    %v480 = vsel %vm448, -1.0, %v191
    %v481 = vsel %vm449, -1.0, %v196
    %v482 = vsel %vm450, -1.0, %v201
    %v483 = vsel %vm451, -1.0, %v206
    %v484 = vsel %vm452, -1.0, %v211
    %v485 = vsel %vm453, -1.0, %v216
    %v486 = vsel %vm454, -1.0, %v141
    %v487 = vsel %vm455, -1.0, %v146
    %v488 = vsel %vm456, -1.0, %v151
    %v489 = vsel %vm457, -1.0, %v156
    %v490 = vsel %vm458, -1.0, %v161
    %v491 = vsel %vm459, -1.0, %v166
    %v492 = vsel %vm460, -1.0, %v171
    %v493 = vsel %vm461, -1.0, %v176
    %v494 = vsel %vm462, -1.0, %v181
    %v495 = vsel %vm463, -1.0, %v186
    %v496 = vsel %vm464, -1.0, %v191
    %v497 = vsel %vm465, -1.0, %v196
    %v498 = vsel %vm466, -1.0, %v201
    %v499 = vsel %vm467, -1.0, %v206
    %v500 = vsel %vm468, -1.0, %v211
    %v501 = vsel %vm469, -1.0, %v216
    %v502 = vcvt.s32.f32 %v237
    %v503 = vcvt.s32.f32 %v238
    %v504 = vcvt.s32.f32 %v239
    %v505 = vcvt.s32.f32 %v240
    %v506 = vcvt.s32.f32 %v241
    %v507 = vcvt.s32.f32 %v242
    %v508 = vcvt.s32.f32 %v243
    %v509 = vcvt.s32.f32 %v244
    %v510 = vcvt.s32.f32 %v245
    %v511 = vcvt.s32.f32 %v246
    %v512 = vcvt.s32.f32 %v247
    %v513 = vcvt.s32.f32 %v248
    %v514 = vcvt.s32.f32 %v249
    %v515 = vcvt.s32.f32 %v250
    %v516 = vcvt.s32.f32 %v251
    %v517 = vcvt.s32.f32 %v252
    %v518 = vmax.f32 %v470, %v474
    %v519 = vmax.f32 %v471, %v475
    %v520 = vmax.f32 %v472, %v476
    %v521 = vmax.f32 %v473, %v477
    %v522 = vmax.f32 %v518, %v478
    %v523 = vmax.f32 %v519, %v479
    %v524 = vmax.f32 %v520, %v480
    %v525 = vmax.f32 %v521, %v481
    %v526 = vmax.f32 %v522, %v482
    %v527 = vmax.f32 %v523, %v483
    %v528 = vmax.f32 %v524, %v484
    %v529 = vmax.f32 %v525, %v485
    %v530 = vmax.f32 %v526, %v527
    %v531 = vmax.f32 %v528, %v529
    %v532 = vmax.f32 %v530, %v531
    %v533 = vrot.slane %v532, 4
    %v534 = vmax.f32 %v532, %v533
    %v535 = vrot.slane %v534, 2
    %v536 = vmax.f32 %v534, %v535
    %v537 = vrot.slane %v536, 1
    %v538 = vmax.f32 %v536, %v537
    %v539 = vld [vmem:[#allocation2] sm:$0x1]
    %vm540 = vcmp.gt.f32.partialorder %v538, %v539
    %vm541 = vcmp.eq.f32.partialorder %v470, %v538
    %vm542 = vcmp.eq.f32.partialorder %v471, %v538
    %vm543 = vcmp.eq.f32.partialorder %v472, %v538
    %vm544 = vcmp.eq.f32.partialorder %v473, %v538
    %vm545 = vcmp.eq.f32.partialorder %v474, %v538
    %vm546 = vcmp.eq.f32.partialorder %v475, %v538
    %vm547 = vcmp.eq.f32.partialorder %v476, %v538
    %vm548 = vcmp.eq.f32.partialorder %v477, %v538
    %vm549 = vcmp.eq.f32.partialorder %v478, %v538
    %vm550 = vcmp.eq.f32.partialorder %v479, %v538
    %vm551 = vcmp.eq.f32.partialorder %v480, %v538
    %vm552 = vcmp.eq.f32.partialorder %v481, %v538
    %vm553 = vcmp.eq.f32.partialorder %v482, %v538
    %vm554 = vcmp.eq.f32.partialorder %v483, %v538
    %vm555 = vcmp.eq.f32.partialorder %v484, %v538
    %vm556 = vcmp.eq.f32.partialorder %v485, %v538
    %v557 = vsel %vm541, %v502, 128.0
    %v558 = vsel %vm542, %v503, 128.0
    %v559 = vsel %vm543, %v504, 128.0
    %v560 = vsel %vm544, %v505, 128.0
    %v561 = vsel %vm545, %v506, 128.0
    %v562 = vsel %vm546, %v507, 128.0
    %v563 = vsel %vm547, %v508, 128.0
    %v564 = vsel %vm548, %v509, 128.0
    %v565 = vsel %vm549, %v510, 128.0
    %v566 = vsel %vm550, %v511, 128.0
    %v567 = vsel %vm551, %v512, 128.0
    %v568 = vsel %vm552, %v513, 128.0
    %v569 = vsel %vm553, %v514, 128.0
    %v570 = vsel %vm554, %v515, 128.0
    %v571 = vsel %vm555, %v516, 128.0
    %v572 = vsel %vm556, %v517, 128.0
    %v573 = vmin.f32 %v557, %v561
    %v574 = vmin.f32 %v558, %v562
    %v575 = vmin.f32 %v559, %v563
    %v576 = vmin.f32 %v560, %v564
    %v577 = vmin.f32 %v573, %v565
    %v578 = vmin.f32 %v574, %v566
    %v579 = vmin.f32 %v575, %v567
    %v580 = vmin.f32 %v576, %v568
    %v581 = vmin.f32 %v577, %v569
    %v582 = vmin.f32 %v578, %v570
    %v583 = vmin.f32 %v579, %v571
    %v584 = vmin.f32 %v580, %v572
    %v585 = vmin.f32 %v581, %v582
    %v586 = vmin.f32 %v583, %v584
    %v587 = vmin.f32 %v585, %v586
    %v588 = vrot.slane %v587, 4
    %v589 = vmin.f32 %v587, %v588
    %v590 = vrot.slane %v589, 2
    %v591 = vmin.f32 %v589, %v590
    %v592 = vrot.slane %v591, 1
    %v593 = vmin.f32 %v591, %v592
    %v594 = vld [vmem:[#allocation3] sm:$0x1]
    %v595 = vsel %vm540, %v593, %v594
    %596 = vst [vmem:[#allocation3] sm:$0x1] %v595
    %v597 = vld [vmem:[#allocation2] sm:$0x1]
    %v598 = vsel %vm540, %v538, %v597
    %599 = vst [vmem:[#allocation2] sm:$0x1] %v598
    %v600 = vmax.f32 %v486, %v490
    %v601 = vmax.f32 %v487, %v491
    %v602 = vmax.f32 %v488, %v492
    %v603 = vmax.f32 %v489, %v493
    %v604 = vmax.f32 %v600, %v494
    %v605 = vmax.f32 %v601, %v495
    %v606 = vmax.f32 %v602, %v496
    %v607 = vmax.f32 %v603, %v497
    %v608 = vmax.f32 %v604, %v498
    %v609 = vmax.f32 %v605, %v499
    %v610 = vmax.f32 %v606, %v500
    %v611 = vmax.f32 %v607, %v501
    %v612 = vmax.f32 %v608, %v609
    %v613 = vmax.f32 %v610, %v611
    %v614 = vmax.f32 %v612, %v613
    %v615 = vrot.slane %v614, 4
    %v616 = vmax.f32 %v614, %v615
    %v617 = vrot.slane %v616, 2
    %v618 = vmax.f32 %v616, %v617
    %v619 = vrot.slane %v618, 1
    %v620 = vmax.f32 %v618, %v619
    %v621 = vld [vmem:[#allocation4] sm:$0x1]
    %vm622 = vcmp.gt.f32.partialorder %v620, %v621
    %vm623 = vcmp.eq.f32.partialorder %v486, %v620
    %vm624 = vcmp.eq.f32.partialorder %v487, %v620
    %vm625 = vcmp.eq.f32.partialorder %v488, %v620
    %vm626 = vcmp.eq.f32.partialorder %v489, %v620
    %vm627 = vcmp.eq.f32.partialorder %v490, %v620
    %vm628 = vcmp.eq.f32.partialorder %v491, %v620
    %vm629 = vcmp.eq.f32.partialorder %v492, %v620
    %vm630 = vcmp.eq.f32.partialorder %v493, %v620
    %vm631 = vcmp.eq.f32.partialorder %v494, %v620
    %vm632 = vcmp.eq.f32.partialorder %v495, %v620
    %vm633 = vcmp.eq.f32.partialorder %v496, %v620
    %vm634 = vcmp.eq.f32.partialorder %v497, %v620
    %vm635 = vcmp.eq.f32.partialorder %v498, %v620
    %vm636 = vcmp.eq.f32.partialorder %v499, %v620
    %vm637 = vcmp.eq.f32.partialorder %v500, %v620
    %vm638 = vcmp.eq.f32.partialorder %v501, %v620
    %v639 = vsel %vm623, %v502, 128.0
    %v640 = vsel %vm624, %v503, 128.0
    %v641 = vsel %vm625, %v504, 128.0
    %v642 = vsel %vm626, %v505, 128.0
    %v643 = vsel %vm627, %v506, 128.0
    %v644 = vsel %vm628, %v507, 128.0
    %v645 = vsel %vm629, %v508, 128.0
    %v646 = vsel %vm630, %v509, 128.0
    %v647 = vsel %vm631, %v510, 128.0
    %v648 = vsel %vm632, %v511, 128.0
    %v649 = vsel %vm633, %v512, 128.0
    %v650 = vsel %vm634, %v513, 128.0
    %v651 = vsel %vm635, %v514, 128.0
    %v652 = vsel %vm636, %v515, 128.0
    %v653 = vsel %vm637, %v516, 128.0
    %v654 = vsel %vm638, %v517, 128.0
    %v655 = vmin.f32 %v639, %v643
    %v656 = vmin.f32 %v640, %v644
    %v657 = vmin.f32 %v641, %v645
    %v658 = vmin.f32 %v642, %v646
    %v659 = vmin.f32 %v655, %v647
    %v660 = vmin.f32 %v656, %v648
    %v661 = vmin.f32 %v657, %v649
    %v662 = vmin.f32 %v658, %v650
    %v663 = vmin.f32 %v659, %v651
    %v664 = vmin.f32 %v660, %v652
    %v665 = vmin.f32 %v661, %v653
    %v666 = vmin.f32 %v662, %v654
    %v667 = vmin.f32 %v663, %v664
    %v668 = vmin.f32 %v665, %v666
    %v669 = vmin.f32 %v667, %v668
    %v670 = vrot.slane %v669, 4
    %v671 = vmin.f32 %v669, %v670
    %v672 = vrot.slane %v671, 2
    %v673 = vmin.f32 %v671, %v672
    %v674 = vrot.slane %v673, 1
    %v675 = vmin.f32 %v673, %v674
    %v676 = vld [vmem:[#allocation5] sm:$0x1]
    %v677 = vsel %vm622, %v675, %v676
    %678 = vst [vmem:[#allocation5] sm:$0x1] %v677
    %v679 = vld [vmem:[#allocation4] sm:$0x1]
    %v680 = vsel %vm622, %v620, %v679
    %681 = vst [vmem:[#allocation4] sm:$0x1] %v680
    // Predicated region
    $region26: #{tpu_custom_call.1} parent=1 // pred_check
      %p682 = pneg %p32
    $region27: #{tpu_custom_call.1} parent=1 // pred_check_branch
      %684 = sbr.rel (%p682) target = $region29
    $region28: #{tpu_custom_call.1} parent=1 // pred_region
      %v685 = vld [vmem:[#allocation2] sm:$0x1]
      %686 = vst [vmem:[#allocation9] sm:$0x1] %v685
      %v687 = vld [vmem:[#allocation4] sm:$0x1]
      %688 = vst [vmem:[#allocation9 + $0x1] sm:$0x1] %v687
      %v689 = vld [vmem:[#allocation3] sm:$0x1]
      %690 = vst [vmem:[#allocation9 + $0x2] sm:$0x1] %v689
      %v691 = vld [vmem:[#allocation5] sm:$0x1]
      %692 = vst [vmem:[#allocation9 + $0x3] sm:$0x1] %v691
    $region29: #{tpu_custom_call.1} parent=1 // pred_fallthru
      _
    // Predicated region
    $region30: #{tpu_custom_call.1} parent=1 // pred_check
      _
    $region31: #{tpu_custom_call.1} parent=1 // pred_check_branch
      %694 = sbr.rel (0) target = $region33
    $region32: #{tpu_custom_call.1} parent=1 // pred_region
      %s696 = ssub.s32 64, 64
      %697 = vsyncadd [#allocation8], %s696
      %s699 = sshll.u32 [#allocation9], 4
      %s700 = int_to_ptr.vmem [resolvable:$true] %s699
      %702 = dma.vmem_to_hbm [thread:$0]  %s700, 64, %s4, [#allocation8]
    $region33: #{tpu_custom_call.1} parent=1 // pred_fallthru
      _
    // Predicated region
    $region34: #{tpu_custom_call.1} parent=1 // pred_check
      _
    $region35: #{tpu_custom_call.1} parent=1 // pred_check_branch
      %704 = sbr.rel (0) target = $region37
    $region36: #{tpu_custom_call.1} parent=1 // pred_region
      %705 = dma.done [#allocation8], 64
    $region37: #{tpu_custom_call.1} parent=1 // pred_fallthru
      _
    %706 = vsyncpa [#allocation7], 1
    %707 = vsyncpa [#allocation8], 1

</llo_original>
